<compile_context>
chip_gen: v7x
topology: tpu7x:2x2x1
jax: 0.10.0
libtpu: 0.0.40
codegen_flags: <defaults>
</compile_context>

<pallas_src>
import functools

import jax
import jax.numpy as jnp
from jax.experimental import pallas as pl
from jax.experimental.pallas import tpu as pltpu

_LANE = 128     # lane width of a vreg
_SUBLANE = 8    # sublane count of a vreg (f32)


def _round_up(n: int, m: int) -> int:
    return ((n + m - 1) // m) * m


def _vmem_capacity_bytes() -> int:
    """Physical VMEM per core; conservative 64 MiB (v7x) if the query fails."""
    try:
        return int(pltpu.get_tpu_info().vmem_capacity_bytes)
    except Exception:
        return 64 << 20


# ----------------------------------------------------------------------------
# Kernels
# ----------------------------------------------------------------------------
def _mlp_fused_kernel(x_ref, *refs, num_layers: int):
    """Fully fused MLP: refs = (w0_t, b0, w1_t, b1, ..., o_ref).

    x_ref:   [block_b, D_in_pad]           f32
    wi_t:    [D_in_pad_i, D_out_pad_i]     bf16 (pre-transposed, zero-padded)
    bi:      [1, D_out_pad_i]              bf16 (zero-padded)
    o_ref:   [block_b, D_out_pad_last]     f32
    Intermediate activations never touch HBM. MXU operands are bf16, the
    accumulate / bias-add / ReLU are f32.
    """
    o_ref = refs[-1]
    x = x_ref[...]
    for li in range(num_layers):
        w_t = refs[2 * li][...]
        b = refs[2 * li + 1][...].astype(jnp.float32)
        x = jnp.dot(x.astype(w_t.dtype), w_t,
                    preferred_element_type=jnp.float32) + b
        if li < num_layers - 1:
            x = jnp.maximum(x, 0.0)
    o_ref[...] = x.astype(o_ref.dtype)


def _linear_tiled_kernel(x_ref, w_ref, b_ref, o_ref, acc_ref, *,
                         apply_relu: bool):
    """One linear layer, K/N tiled: y = [relu](x @ w_t + b).

    Grid = (batch_blocks, n_blocks, k_blocks), reduction axis (k) last.
    acc_ref is an f32 VMEM accumulator persisting across the k axis.
    """
    k = pl.program_id(2)

    @pl.when(k == 0)
    def _():
        acc_ref[...] = jnp.zeros_like(acc_ref)

    acc_ref[...] += jnp.dot(x_ref[...].astype(w_ref.dtype), w_ref[...],
                            preferred_element_type=jnp.float32)

    @pl.when(k == pl.num_programs(2) - 1)
    def _():
        y = acc_ref[...] + b_ref[...].astype(jnp.float32)
        if apply_relu:
            y = jnp.maximum(y, 0.0)
        o_ref[...] = y.astype(o_ref.dtype)


# ----------------------------------------------------------------------------
# Parameter init / layout prep
# ----------------------------------------------------------------------------
def init_mlp_params(key, input_dim, hidden_dim, output_dim, num_layers,
                    decoder_small_weights_init_last_layer=False,
                    decoder_small_weights_init_last_layer_std=0.001):
    """Matches reset_parameters(): bias = 0, weight ~ kaiming_normal_
    (nonlinearity='relu') i.e. std = sqrt(2 / fan_in). Weights in the PyTorch
    nn.Linear convention [out_features, in_features], f32."""
    h = [hidden_dim] * (num_layers - 1)
    in_dims = [input_dim] + h
    out_dims = h + [output_dim]
    params = []
    keys = jax.random.split(key, num_layers)
    for li, (din, dout) in enumerate(zip(in_dims, out_dims)):
        std = (2.0 / din) ** 0.5
        if decoder_small_weights_init_last_layer and li == num_layers - 1:
            std = decoder_small_weights_init_last_layer_std
        w = std * jax.random.normal(keys[li], (dout, din), dtype=jnp.float32)
        b = jnp.zeros((dout,), dtype=jnp.float32)
        params.append((w, b))
    return params


def prepare_mlp_params(params, weight_dtype=jnp.bfloat16):
    """One-time host-side layout plumbing: transpose each weight to [K, N],
    zero-pad feature dims to multiples of 128 lanes, and cast to bf16 (MXU
    native on all generations; halves weight HBM->VMEM bytes and VMEM
    residency). Biases become (1, N_pad) bf16. Zero padding keeps the real
    output columns exact."""
    prepped = []
    for w, b in params:
        d_out, d_in = w.shape
        k_pad = _round_up(d_in, _LANE)
        n_pad = _round_up(d_out, _LANE)
        w_t = jnp.zeros((k_pad, n_pad), weight_dtype).at[:d_in, :d_out].set(
            w.T.astype(weight_dtype))
        b2 = jnp.zeros((1, n_pad), weight_dtype).at[0, :d_out].set(
            b.astype(weight_dtype))
        prepped.append((w_t, b2))
    return prepped


# ----------------------------------------------------------------------------
# Forward wrappers
# ----------------------------------------------------------------------------
def _choose_block_b(B: int) -> int:
    if B < 16:
        return _round_up(max(B, 1), _SUBLANE)
    # >= 2 blocks so v7x's two TensorCores both get work; <= 512 rows/block;
    # number of blocks chosen so awkward B isn't rounded up to a nearly-empty
    # trailing block.
    n_blocks = max(2, pl.cdiv(B, 512))
    return _round_up(pl.cdiv(B, n_blocks), _SUBLANE)


def _fused_forward(x_p, prepped_params, block_b, vmem_limit,
                   single_buffer_weights):
    b_pad, k_pad = x_p.shape
    n_out_pad = prepped_params[-1][0].shape[1]
    num_layers = len(prepped_params)

    weight_mode = {}
    if single_buffer_weights:
        # Grid-invariant blocks: default double-buffering just wastes VMEM.
        weight_mode = dict(pipeline_mode=pl.Buffered(1))

    flat_wb = []
    in_specs = [pl.BlockSpec((block_b, k_pad), lambda i: (i, 0))]
    for (w_t, b2) in prepped_params:
        flat_wb.extend([w_t, b2])
        in_specs.append(pl.BlockSpec(w_t.shape, lambda i: (0, 0), **weight_mode))
        in_specs.append(pl.BlockSpec(b2.shape, lambda i: (0, 0), **weight_mode))

    kernel = functools.partial(_mlp_fused_kernel, num_layers=num_layers)
    return pl.pallas_call(
        kernel,
        out_shape=jax.ShapeDtypeStruct((b_pad, n_out_pad), x_p.dtype),
        grid=(b_pad // block_b,),
        in_specs=in_specs,
        out_specs=pl.BlockSpec((block_b, n_out_pad), lambda i: (i, 0)),
        compiler_params=pltpu.CompilerParams(
            dimension_semantics=("parallel",),
            vmem_limit_bytes=vmem_limit),
    )(x_p, *flat_wb)


def _pick_tile(dim: int, cap: int = 512) -> int:
    for t in (cap, 256, 128):
        if t <= dim and dim % t == 0:
            return t
    return dim  # dims are 128-multiples, so this is only hit for dim == 128 pads


def _linear_tiled(x_p, w_t, b2, *, apply_relu, block_b, vmem_cap):
    """Fallback path: one layer, K/N tiled (weights too big for residency)."""
    b_pad, k_pad = x_p.shape
    _, n_pad = w_t.shape
    tk = _pick_tile(k_pad)
    tn = _pick_tile(n_pad)
    grid = (b_pad // block_b, n_pad // tn, k_pad // tk)

    need = int(1.25 * (
        2 * (block_b * tk * 4 + tk * tn * w_t.dtype.itemsize
             + block_b * tn * 4 + tn * b2.dtype.itemsize)
        + block_b * tn * 4))
    vmem_limit = min(max(need, 32 << 20), int(0.75 * vmem_cap))

    kernel = functools.partial(_linear_tiled_kernel, apply_relu=apply_relu)
    return pl.pallas_call(
        kernel,
        out_shape=jax.ShapeDtypeStruct((b_pad, n_pad), jnp.float32),
        grid=grid,
        in_specs=[
            pl.BlockSpec((block_b, tk), lambda i, j, k: (i, k)),
            pl.BlockSpec((tk, tn), lambda i, j, k: (k, j)),
            pl.BlockSpec((1, tn), lambda i, j, k: (0, j)),
        ],
        out_specs=pl.BlockSpec((block_b, tn), lambda i, j, k: (i, j)),
        scratch_shapes=[pltpu.VMEM((block_b, tn), jnp.float32)],
        compiler_params=pltpu.CompilerParams(
            dimension_semantics=("parallel", "parallel", "arbitrary"),
            vmem_limit_bytes=vmem_limit),
    )(x_p, w_t, b2)


def mlp_forward(x, prepped_params, output_dim, *, force_tiled=False):
    """MLP forward. x: [B, input_dim] f32 -> flattened [B * output_dim]."""
    B, d_in = x.shape
    num_layers = len(prepped_params)
    k_pad = prepped_params[0][0].shape[0]
    n_out_pad = prepped_params[-1][0].shape[1]

    block_b = _choose_block_b(B)
    b_pad = _round_up(B, block_b)

    # Skip the padded copy (extra HBM write + re-read) when already aligned.
    if b_pad == B and k_pad == d_in:
        x_p = x
    else:
        x_p = jnp.zeros((b_pad, k_pad), x.dtype).at[:B, :d_in].set(x)

    vmem_cap = _vmem_capacity_bytes()
    budget = int(0.75 * vmem_cap)

    weight_bytes = sum(w.size * w.dtype.itemsize + b.size * b.dtype.itemsize
                       for w, b in prepped_params)
    max_feat_pad = max([k_pad] + [w.shape[1] for w, _ in prepped_params])
    act_bytes = 2 * block_b * (k_pad + n_out_pad) * 4   # double-buffered in/out
    inter_bytes = 2 * block_b * max_feat_pad * 4        # in-flight activations
    fused_need = int(1.25 * (weight_bytes + act_bytes + inter_bytes))

    if (not force_tiled) and fused_need <= budget:
        vmem_limit = min(max(fused_need, 32 << 20), budget)
        try:
            out_pad = _fused_forward(x_p, prepped_params, block_b, vmem_limit,
                                     single_buffer_weights=True)
        except Exception:
            # If this Pallas build rejects pl.Buffered(1), retry with default
            # double-buffering (correct, just one extra weight copy in VMEM).
            out_pad = _fused_forward(x_p, prepped_params, block_b, vmem_limit,
                                     single_buffer_weights=False)
    else:
        # VMEM-budget guard (e.g. v7x 64 MiB): weights can't all stay resident,
        # so run layer-by-layer with K/N-tiled matmuls.
        cur = x_p
        for li, (w_t, b2) in enumerate(prepped_params):
            cur = _linear_tiled(cur, w_t, b2,
                                apply_relu=(li < num_layers - 1),
                                block_b=block_b, vmem_cap=vmem_cap)
        out_pad = cur

    # Slice off lane / batch padding, then flatten like x.view(-1).
    return out_pad[:B, :output_dim].reshape(-1)


# ----------------------------------------------------------------------------
# Self-test
# ----------------------------------------------------------------------------
def _reference_bf16(x, params, num_layers):
    """Pure-JAX reference mirroring the kernel numerics (bf16 operands, f32
    accumulate), so the check stays tight even with bf16 weights."""
    ref = x
    for i, (w, b) in enumerate(params):
        w_q = w.astype(jnp.bfloat16).astype(jnp.float32)
        a_q = ref.astype(jnp.bfloat16).astype(jnp.float32)
        ref = a_q @ w_q.T + b
        if i < num_layers - 1:
            ref = jnp.maximum(ref, 0.0)
    return ref.reshape(-1)


if __name__ == "__main__":
    key = jax.random.PRNGKey(0)
    k_x, k_p, k_x2 = jax.random.split(key, 3)

    # Small shapes consistent with the module: batch=8, input=32, hidden=32,
    # output=16, 3 layers.
    batch, input_dim, hidden_dim, output_dim, num_layers = 8, 32, 32, 16, 3

    x = jax.random.normal(k_x, (batch, input_dim), dtype=jnp.float32)
    params = init_mlp_params(k_p, input_dim, hidden_dim, output_dim, num_layers)
    prepped = prepare_mlp_params(params)

    # Fused single-kernel path.
    out = mlp_forward(x, prepped, output_dim)
    jax.block_until_ready(out)
    ref = _reference_bf16(x, params, num_layers)
    assert out.shape == (batch * output_dim,)
    assert jnp.allclose(out, ref, atol=1e-2, rtol=1e-2)

    # Exercise the VMEM-guard (per-layer tiled) fallback path as well.
    out_tiled = mlp_forward(x, prepped, output_dim, force_tiled=True)
    jax.block_until_ready(out_tiled)
    assert jnp.allclose(out_tiled, ref, atol=1e-2, rtol=1e-2)

    # Exercise the multi-block batch grid (>=2 blocks once B >= 16).
    x2 = jax.random.normal(k_x2, (64, input_dim), dtype=jnp.float32)
    out2 = mlp_forward(x2, prepped, output_dim)
    jax.block_until_ready(out2)
    ref2 = _reference_bf16(x2, params, num_layers)
    assert out2.shape == (64 * output_dim,)
    assert jnp.allclose(out2, ref2, atol=1e-2, rtol=1e-2)

    print("KERNEL_OK")
</pallas_src>

<mosaic_0001>
module attributes {stable_mosaic.version = 11 : i64} {
  func.func @_mlp_fused_kernel(%arg0: i32, %arg1: memref<8x128xf32, #tpu.memory_space<vmem>>, %arg2: memref<128x128xbf16, #tpu.memory_space<vmem>>, %arg3: memref<1x128xbf16, #tpu.memory_space<vmem>>, %arg4: memref<128x128xbf16, #tpu.memory_space<vmem>>, %arg5: memref<1x128xbf16, #tpu.memory_space<vmem>>, %arg6: memref<128x128xbf16, #tpu.memory_space<vmem>>, %arg7: memref<1x128xbf16, #tpu.memory_space<vmem>>, %arg8: memref<8x128xf32, #tpu.memory_space<vmem>>) attributes {dimension_semantics = [#tpu.dimension_semantics<parallel>], iteration_bounds = array<i64: 1>, scalar_prefetch = 0 : i64, scratch_operands = 0 : i64, tpu.core_type = #tpu.core_type<tc>, window_params = [{transform_indices = @transform_0, window_bounds = array<i64: 8, 128>}, {pipeline_mode = #tpu.pipeline_mode<synchronous>, transform_indices = @transform_1, window_bounds = array<i64: 128, 128>}, {pipeline_mode = #tpu.pipeline_mode<synchronous>, transform_indices = @transform_2, window_bounds = array<i64: 1, 128>}, {pipeline_mode = #tpu.pipeline_mode<synchronous>, transform_indices = @transform_3, window_bounds = array<i64: 128, 128>}, {pipeline_mode = #tpu.pipeline_mode<synchronous>, transform_indices = @transform_4, window_bounds = array<i64: 1, 128>}, {pipeline_mode = #tpu.pipeline_mode<synchronous>, transform_indices = @transform_5, window_bounds = array<i64: 128, 128>}, {pipeline_mode = #tpu.pipeline_mode<synchronous>, transform_indices = @transform_6, window_bounds = array<i64: 1, 128>}, {transform_indices = @transform_7, window_bounds = array<i64: 8, 128>}]} {
    %c0 = arith.constant 0 : index
    %c0_0 = arith.constant 0 : index
    %0 = vector.load %arg1[%c0, %c0_0] : memref<8x128xf32, #tpu.memory_space<vmem>>, vector<8x128xf32>
    %c0_1 = arith.constant 0 : index
    %c0_2 = arith.constant 0 : index
    %1 = vector.load %arg2[%c0_1, %c0_2] : memref<128x128xbf16, #tpu.memory_space<vmem>>, vector<128x128xbf16>
    %c0_3 = arith.constant 0 : index
    %c0_4 = arith.constant 0 : index
    %2 = vector.load %arg3[%c0_3, %c0_4] : memref<1x128xbf16, #tpu.memory_space<vmem>>, vector<1x128xbf16>
    %3 = arith.extf %2 : vector<1x128xbf16> to vector<1x128xf32>
    %4 = arith.truncf %0 : vector<8x128xf32> to vector<8x128xbf16>
    %cst = arith.constant dense<0.000000e+00> : vector<8x128xf32>
    %5 = tpu.matmul %4, %1, %cst {dimension_numbers = #tpu.dot_dimension_numbers<[1], [0], [0], [1], [0, 0, 1, 1], [], []>} : vector<8x128xbf16>, vector<128x128xbf16>, vector<8x128xf32> -> vector<8x128xf32>
    %6 = vector.broadcast %3 : vector<1x128xf32> to vector<8x128xf32>
    %7 = arith.addf %5, %6 : vector<8x128xf32>
    %cst_5 = arith.constant 0.000000e+00 : f32
    %8 = vector.broadcast %cst_5 : f32 to vector<8x128xf32>
    %9 = arith.maximumf %7, %8 : vector<8x128xf32>
    %c0_6 = arith.constant 0 : index
    %c0_7 = arith.constant 0 : index
    %10 = vector.load %arg4[%c0_6, %c0_7] : memref<128x128xbf16, #tpu.memory_space<vmem>>, vector<128x128xbf16>
    %c0_8 = arith.constant 0 : index
    %c0_9 = arith.constant 0 : index
    %11 = vector.load %arg5[%c0_8, %c0_9] : memref<1x128xbf16, #tpu.memory_space<vmem>>, vector<1x128xbf16>
    %12 = arith.extf %11 : vector<1x128xbf16> to vector<1x128xf32>
    %13 = arith.truncf %9 : vector<8x128xf32> to vector<8x128xbf16>
    %cst_10 = arith.constant dense<0.000000e+00> : vector<8x128xf32>
    %14 = tpu.matmul %13, %10, %cst_10 {dimension_numbers = #tpu.dot_dimension_numbers<[1], [0], [0], [1], [0, 0, 1, 1], [], []>} : vector<8x128xbf16>, vector<128x128xbf16>, vector<8x128xf32> -> vector<8x128xf32>
    %15 = vector.broadcast %12 : vector<1x128xf32> to vector<8x128xf32>
    %16 = arith.addf %14, %15 : vector<8x128xf32>
    %cst_11 = arith.constant 0.000000e+00 : f32
    %17 = vector.broadcast %cst_11 : f32 to vector<8x128xf32>
    %18 = arith.maximumf %16, %17 : vector<8x128xf32>
    %c0_12 = arith.constant 0 : index
    %c0_13 = arith.constant 0 : index
    %19 = vector.load %arg6[%c0_12, %c0_13] : memref<128x128xbf16, #tpu.memory_space<vmem>>, vector<128x128xbf16>
    %c0_14 = arith.constant 0 : index
    %c0_15 = arith.constant 0 : index
    %20 = vector.load %arg7[%c0_14, %c0_15] : memref<1x128xbf16, #tpu.memory_space<vmem>>, vector<1x128xbf16>
    %21 = arith.extf %20 : vector<1x128xbf16> to vector<1x128xf32>
    %22 = arith.truncf %18 : vector<8x128xf32> to vector<8x128xbf16>
    %cst_16 = arith.constant dense<0.000000e+00> : vector<8x128xf32>
    %23 = tpu.matmul %22, %19, %cst_16 {dimension_numbers = #tpu.dot_dimension_numbers<[1], [0], [0], [1], [0, 0, 1, 1], [], []>} : vector<8x128xbf16>, vector<128x128xbf16>, vector<8x128xf32> -> vector<8x128xf32>
    %24 = vector.broadcast %21 : vector<1x128xf32> to vector<8x128xf32>
    %25 = arith.addf %23, %24 : vector<8x128xf32>
    %c0_17 = arith.constant 0 : index
    %c0_18 = arith.constant 0 : index
    %26 = vector.load %arg8[%c0_17, %c0_18] : memref<8x128xf32, #tpu.memory_space<vmem>>, vector<8x128xf32>
    tpu.vector_store %arg8[%c0_17, %c0_18], %25 {strides = array<i32>} : memref<8x128xf32, #tpu.memory_space<vmem>>, vector<8x128xf32>,
    return
  }
  func.func @transform_0(%arg0: i32) -> (i32, i32) {
    %c0_i32 = arith.constant 0 : i32
    %c0_i32_0 = arith.constant 0 : i32
    return %arg0, %c0_i32 : i32, i32
  }
  func.func @transform_1(%arg0: i32) -> (i32, i32) {
    %c0_i32 = arith.constant 0 : i32
    %c0_i32_0 = arith.constant 0 : i32
    %c0_i32_1 = arith.constant 0 : i32
    return %c0_i32, %c0_i32_0 : i32, i32
  }
  func.func @transform_2(%arg0: i32) -> (i32, i32) {
    %c0_i32 = arith.constant 0 : i32
    %c0_i32_0 = arith.constant 0 : i32
    %c0_i32_1 = arith.constant 0 : i32
    return %c0_i32, %c0_i32_0 : i32, i32
  }
  func.func @transform_3(%arg0: i32) -> (i32, i32) {
    %c0_i32 = arith.constant 0 : i32
    %c0_i32_0 = arith.constant 0 : i32
    %c0_i32_1 = arith.constant 0 : i32
    return %c0_i32, %c0_i32_0 : i32, i32
  }
  func.func @transform_4(%arg0: i32) -> (i32, i32) {
    %c0_i32 = arith.constant 0 : i32
    %c0_i32_0 = arith.constant 0 : i32
    %c0_i32_1 = arith.constant 0 : i32
    return %c0_i32, %c0_i32_0 : i32, i32
  }
  func.func @transform_5(%arg0: i32) -> (i32, i32) {
    %c0_i32 = arith.constant 0 : i32
    %c0_i32_0 = arith.constant 0 : i32
    %c0_i32_1 = arith.constant 0 : i32
    return %c0_i32, %c0_i32_0 : i32, i32
  }
  func.func @transform_6(%arg0: i32) -> (i32, i32) {
    %c0_i32 = arith.constant 0 : i32
    %c0_i32_0 = arith.constant 0 : i32
    %c0_i32_1 = arith.constant 0 : i32
    return %c0_i32, %c0_i32_0 : i32, i32
  }
  func.func @transform_7(%arg0: i32) -> (i32, i32) {
    %c0_i32 = arith.constant 0 : i32
    %c0_i32_0 = arith.constant 0 : i32
    return %arg0, %c0_i32 : i32, i32
  }
}

module attributes {stable_mosaic.version = 11 : i64} {
  func.func @_mlp_fused_kernel(%arg0: i32, %arg1: memref<8x128xf32, #tpu.memory_space<vmem>>, %arg2: memref<128x128xbf16, #tpu.memory_space<vmem>>, %arg3: memref<1x128xbf16, #tpu.memory_space<vmem>>, %arg4: memref<128x128xbf16, #tpu.memory_space<vmem>>, %arg5: memref<1x128xbf16, #tpu.memory_space<vmem>>, %arg6: memref<128x128xbf16, #tpu.memory_space<vmem>>, %arg7: memref<1x128xbf16, #tpu.memory_space<vmem>>, %arg8: memref<8x128xf32, #tpu.memory_space<vmem>>) attributes {dimension_semantics = [#tpu.dimension_semantics<parallel>], iteration_bounds = array<i64: 1>, scalar_prefetch = 0 : i64, scratch_operands = 0 : i64, tpu.core_type = #tpu.core_type<tc>, window_params = [{transform_indices = @transform_0, window_bounds = array<i64: 8, 128>}, {pipeline_mode = #tpu.pipeline_mode<synchronous>, transform_indices = @transform_1, window_bounds = array<i64: 128, 128>}, {pipeline_mode = #tpu.pipeline_mode<synchronous>, transform_indices = @transform_2, window_bounds = array<i64: 1, 128>}, {pipeline_mode = #tpu.pipeline_mode<synchronous>, transform_indices = @transform_3, window_bounds = array<i64: 128, 128>}, {pipeline_mode = #tpu.pipeline_mode<synchronous>, transform_indices = @transform_4, window_bounds = array<i64: 1, 128>}, {pipeline_mode = #tpu.pipeline_mode<synchronous>, transform_indices = @transform_5, window_bounds = array<i64: 128, 128>}, {pipeline_mode = #tpu.pipeline_mode<synchronous>, transform_indices = @transform_6, window_bounds = array<i64: 1, 128>}, {transform_indices = @transform_7, window_bounds = array<i64: 8, 128>}]} {
    %c0 = arith.constant 0 : index
    %c0_0 = arith.constant 0 : index
    %0 = vector.load %arg1[%c0, %c0_0] : memref<8x128xf32, #tpu.memory_space<vmem>>, vector<8x128xf32>
    %c0_1 = arith.constant 0 : index
    %c0_2 = arith.constant 0 : index
    %1 = vector.load %arg2[%c0_1, %c0_2] : memref<128x128xbf16, #tpu.memory_space<vmem>>, vector<128x128xbf16>
    %c0_3 = arith.constant 0 : index
    %c0_4 = arith.constant 0 : index
    %2 = vector.load %arg3[%c0_3, %c0_4] : memref<1x128xbf16, #tpu.memory_space<vmem>>, vector<1x128xbf16>
    %3 = arith.extf %2 : vector<1x128xbf16> to vector<1x128xf32>
    %4 = arith.truncf %0 : vector<8x128xf32> to vector<8x128xbf16>
    %cst = arith.constant dense<0.000000e+00> : vector<8x128xf32>
    %5 = tpu.matmul %4, %1, %cst {dimension_numbers = #tpu.dot_dimension_numbers<[1], [0], [0], [1], [0, 0, 1, 1], [], []>} : vector<8x128xbf16>, vector<128x128xbf16>, vector<8x128xf32> -> vector<8x128xf32>
    %6 = vector.broadcast %3 : vector<1x128xf32> to vector<8x128xf32>
    %7 = arith.addf %5, %6 : vector<8x128xf32>
    %cst_5 = arith.constant 0.000000e+00 : f32
    %8 = vector.broadcast %cst_5 : f32 to vector<8x128xf32>
    %9 = arith.maximumf %7, %8 : vector<8x128xf32>
    %c0_6 = arith.constant 0 : index
    %c0_7 = arith.constant 0 : index
    %10 = vector.load %arg4[%c0_6, %c0_7] : memref<128x128xbf16, #tpu.memory_space<vmem>>, vector<128x128xbf16>
    %c0_8 = arith.constant 0 : index
    %c0_9 = arith.constant 0 : index
    %11 = vector.load %arg5[%c0_8, %c0_9] : memref<1x128xbf16, #tpu.memory_space<vmem>>, vector<1x128xbf16>
    %12 = arith.extf %11 : vector<1x128xbf16> to vector<1x128xf32>
    %13 = arith.truncf %9 : vector<8x128xf32> to vector<8x128xbf16>
    %cst_10 = arith.constant dense<0.000000e+00> : vector<8x128xf32>
    %14 = tpu.matmul %13, %10, %cst_10 {dimension_numbers = #tpu.dot_dimension_numbers<[1], [0], [0], [1], [0, 0, 1, 1], [], []>} : vector<8x128xbf16>, vector<128x128xbf16>, vector<8x128xf32> -> vector<8x128xf32>
    %15 = vector.broadcast %12 : vector<1x128xf32> to vector<8x128xf32>
    %16 = arith.addf %14, %15 : vector<8x128xf32>
    %cst_11 = arith.constant 0.000000e+00 : f32
    %17 = vector.broadcast %cst_11 : f32 to vector<8x128xf32>
    %18 = arith.maximumf %16, %17 : vector<8x128xf32>
    %c0_12 = arith.constant 0 : index
    %c0_13 = arith.constant 0 : index
    %19 = vector.load %arg6[%c0_12, %c0_13] : memref<128x128xbf16, #tpu.memory_space<vmem>>, vector<128x128xbf16>
    %c0_14 = arith.constant 0 : index
    %c0_15 = arith.constant 0 : index
    %20 = vector.load %arg7[%c0_14, %c0_15] : memref<1x128xbf16, #tpu.memory_space<vmem>>, vector<1x128xbf16>
    %21 = arith.extf %20 : vector<1x128xbf16> to vector<1x128xf32>
    %22 = arith.truncf %18 : vector<8x128xf32> to vector<8x128xbf16>
    %cst_16 = arith.constant dense<0.000000e+00> : vector<8x128xf32>
    %23 = tpu.matmul %22, %19, %cst_16 {dimension_numbers = #tpu.dot_dimension_numbers<[1], [0], [0], [1], [0, 0, 1, 1], [], []>} : vector<8x128xbf16>, vector<128x128xbf16>, vector<8x128xf32> -> vector<8x128xf32>
    %24 = vector.broadcast %21 : vector<1x128xf32> to vector<8x128xf32>
    %25 = arith.addf %23, %24 : vector<8x128xf32>
    %c0_17 = arith.constant 0 : index
    %c0_18 = arith.constant 0 : index
    %26 = vector.load %arg8[%c0_17, %c0_18] : memref<8x128xf32, #tpu.memory_space<vmem>>, vector<8x128xf32>
    tpu.vector_store %arg8[%c0_17, %c0_18], %25 {strides = array<i32>} : memref<8x128xf32, #tpu.memory_space<vmem>>, vector<8x128xf32>,
    return
  }
  func.func @transform_0(%arg0: i32) -> (i32, i32) {
    %c0_i32 = arith.constant 0 : i32
    %c0_i32_0 = arith.constant 0 : i32
    return %arg0, %c0_i32 : i32, i32
  }
  func.func @transform_1(%arg0: i32) -> (i32, i32) {
    %c0_i32 = arith.constant 0 : i32
    %c0_i32_0 = arith.constant 0 : i32
    %c0_i32_1 = arith.constant 0 : i32
    return %c0_i32, %c0_i32_0 : i32, i32
  }
  func.func @transform_2(%arg0: i32) -> (i32, i32) {
    %c0_i32 = arith.constant 0 : i32
    %c0_i32_0 = arith.constant 0 : i32
    %c0_i32_1 = arith.constant 0 : i32
    return %c0_i32, %c0_i32_0 : i32, i32
  }
  func.func @transform_3(%arg0: i32) -> (i32, i32) {
    %c0_i32 = arith.constant 0 : i32
    %c0_i32_0 = arith.constant 0 : i32
    %c0_i32_1 = arith.constant 0 : i32
    return %c0_i32, %c0_i32_0 : i32, i32
  }
  func.func @transform_4(%arg0: i32) -> (i32, i32) {
    %c0_i32 = arith.constant 0 : i32
    %c0_i32_0 = arith.constant 0 : i32
    %c0_i32_1 = arith.constant 0 : i32
    return %c0_i32, %c0_i32_0 : i32, i32
  }
  func.func @transform_5(%arg0: i32) -> (i32, i32) {
    %c0_i32 = arith.constant 0 : i32
    %c0_i32_0 = arith.constant 0 : i32
    %c0_i32_1 = arith.constant 0 : i32
    return %c0_i32, %c0_i32_0 : i32, i32
  }
  func.func @transform_6(%arg0: i32) -> (i32, i32) {
    %c0_i32 = arith.constant 0 : i32
    %c0_i32_0 = arith.constant 0 : i32
    %c0_i32_1 = arith.constant 0 : i32
    return %c0_i32, %c0_i32_0 : i32, i32
  }
  func.func @transform_7(%arg0: i32) -> (i32, i32) {
    %c0_i32 = arith.constant 0 : i32
    %c0_i32_0 = arith.constant 0 : i32
    return %arg0, %c0_i32 : i32, i32
  }
}

</mosaic_0001>

<llo_original>
// kernel: tpu_custom_call.1
$region0: #{tpu_custom_call.1}
  #allocation0 [shape = 'u32[]', space=smem, size = 0x4, offset = 0x4, fixed_abs, tag = 'smem constant byte address 0x4 - core index']
  #allocation1 [shape = 'u32[144,128]{1,0:T(1,128)}', space=vmem, size = 0x12000, scoped, tag = 'internal scratch']
  %s0 = inlined_call_operand.hbm [shape: f32[8,128], index: 0, kind: input, shape index: {}]
  %s1 = inlined_call_operand.hbm [shape: bf16[128,128], index: 1, kind: input, shape index: {}]
  %s2 = inlined_call_operand.vmem [shape: bf16[1,128], index: 2, kind: input, shape index: {}]
  %s3 = inlined_call_operand.hbm [shape: bf16[128,128], index: 3, kind: input, shape index: {}]
  %s4 = inlined_call_operand.vmem [shape: bf16[1,128], index: 4, kind: input, shape index: {}]
  %s5 = inlined_call_operand.hbm [shape: bf16[128,128], index: 5, kind: input, shape index: {}]
  %s6 = inlined_call_operand.vmem [shape: bf16[1,128], index: 6, kind: input, shape index: {}]
  %s7 = inlined_call_operand.hbm [shape: f32[8,128], index: 7, kind: output, shape index: {}]
  %s8 = sld [smem:[#allocation0]]
  $region54: #{tpu_custom_call.1} parent=0
    _
  %s10 = ssub.s32 1, %s8
  %s11 = scalar_select 0, %s10, %s8
  $region1: #{tpu_custom_call.1} parent=0
    #allocation2 [shape = 'u8[4096]{0}', space=vmem, size = 0x1000, scoped, tag = 'input window, operand 0, single buffered']
    #allocation3 [shape = 's32[1]{0}', space=sflag, size = 0x4, scoped, tag = 'scoped memory for tpu_custom_call.1']
    #allocation4 [shape = 's32[1]{0}', space=sflag, size = 0x4, scoped, tag = 'scoped memory for tpu_custom_call.1']
    #allocation5 [shape = 'u8[32768]{0}', space=vmem, size = 0x8000, scoped, tag = 'input window, operand 1, single buffered']
    #allocation6 [shape = 's32[1]{0}', space=sflag, size = 0x4, scoped, tag = 'scoped memory for tpu_custom_call.1']
    #allocation7 [shape = 'u8[32768]{0}', space=vmem, size = 0x8000, scoped, tag = 'input window, operand 3, single buffered']
    #allocation8 [shape = 'u8[32768]{0}', space=vmem, size = 0x8000, scoped, tag = 'input window, operand 5, single buffered']
    #allocation9 [shape = 's32[1]{0}', space=sflag, size = 0x4, scoped, tag = 'scoped memory for tpu_custom_call.1']
    #allocation10 [shape = 'u8[4096]{0}', space=vmem, size = 0x1000, scoped, tag = 'output window, operand 0, single buffered']
    %12 = vsyncpa [#allocation3], 0
    %13 = vsyncpa [#allocation6], 0
    %14 = vsyncpa [#allocation9], 0
    %15 = vsyncpa [#allocation4], 0
    // Predicated region
    $region2: #{tpu_custom_call.1} parent=1 // pred_check
      _
    $region3: #{tpu_custom_call.1} parent=1 // pred_check_branch
      %17 = sbr.rel (0) target = $region5
    $region4: #{tpu_custom_call.1} parent=1 // pred_region
      %s19 = ssub.s32 128, 128
      %20 = vsyncadd [#allocation3], %s19
      %s22 = sshll.u32 [#allocation2], 4
      %s23 = int_to_ptr.vmem [resolvable:$true] %s22
      %25 = dma.hbm_to_vmem [thread:$0]  %s0, 128, %s23, [#allocation3]
    $region5: #{tpu_custom_call.1} parent=1 // pred_fallthru
      _
    // Predicated region
    $region6: #{tpu_custom_call.1} parent=1 // pred_check
      _
    $region7: #{tpu_custom_call.1} parent=1 // pred_check_branch
      %27 = sbr.rel (0) target = $region9
    $region8: #{tpu_custom_call.1} parent=1 // pred_region
      %s29 = ssub.s32 1024, 1024
      %30 = vsyncadd [#allocation6], %s29
      %s31 = sshll.u32 [#allocation5], 4
      %s32 = int_to_ptr.vmem [resolvable:$true] %s31
      %37 = dma.hbm_to_vmem [thread:$0]  %s1, 1024, %s32, [#allocation6], 64, 64, 4
    $region9: #{tpu_custom_call.1} parent=1 // pred_fallthru
      _
    // Predicated region
    $region10: #{tpu_custom_call.1} parent=1 // pred_check
      _
    $region11: #{tpu_custom_call.1} parent=1 // pred_check_branch
      %39 = sbr.rel (0) target = $region13
    $region12: #{tpu_custom_call.1} parent=1 // pred_region
      _
    $region13: #{tpu_custom_call.1} parent=1 // pred_fallthru
      _
    // Predicated region
    $region14: #{tpu_custom_call.1} parent=1 // pred_check
      _
    $region15: #{tpu_custom_call.1} parent=1 // pred_check_branch
      %41 = sbr.rel (0) target = $region17
    $region16: #{tpu_custom_call.1} parent=1 // pred_region
      %s43 = ssub.s32 1024, 1024
      %44 = vsyncadd [#allocation6], %s43
      %s45 = sshll.u32 [#allocation7], 4
      %s46 = int_to_ptr.vmem [resolvable:$true] %s45
      %51 = dma.hbm_to_vmem [thread:$0]  %s3, 1024, %s46, [#allocation6], 64, 64, 4
    $region17: #{tpu_custom_call.1} parent=1 // pred_fallthru
      _
    // Predicated region
    $region18: #{tpu_custom_call.1} parent=1 // pred_check
      _
    $region19: #{tpu_custom_call.1} parent=1 // pred_check_branch
      %53 = sbr.rel (0) target = $region21
    $region20: #{tpu_custom_call.1} parent=1 // pred_region
      _
    $region21: #{tpu_custom_call.1} parent=1 // pred_fallthru
      _
    // Predicated region
    $region22: #{tpu_custom_call.1} parent=1 // pred_check
      _
    $region23: #{tpu_custom_call.1} parent=1 // pred_check_branch
      %55 = sbr.rel (0) target = $region25
    $region24: #{tpu_custom_call.1} parent=1 // pred_region
      %s57 = ssub.s32 1024, 1024
      %58 = vsyncadd [#allocation9], %s57
      %s59 = sshll.u32 [#allocation8], 4
      %s60 = int_to_ptr.vmem [resolvable:$true] %s59
      %65 = dma.hbm_to_vmem [thread:$0]  %s5, 1024, %s60, [#allocation9], 64, 64, 4
    $region25: #{tpu_custom_call.1} parent=1 // pred_fallthru
      _
    // Predicated region
    $region26: #{tpu_custom_call.1} parent=1 // pred_check
      _
    $region27: #{tpu_custom_call.1} parent=1 // pred_check_branch
      %67 = sbr.rel (0) target = $region29
    $region28: #{tpu_custom_call.1} parent=1 // pred_region
      _
    $region29: #{tpu_custom_call.1} parent=1 // pred_fallthru
      _
    // Predicated region
    $region30: #{tpu_custom_call.1} parent=1 // pred_check
      _
    $region31: #{tpu_custom_call.1} parent=1 // pred_check_branch
      %69 = sbr.rel (0) target = $region33
    $region32: #{tpu_custom_call.1} parent=1 // pred_region
      %70 = dma.done [#allocation3], 128
    $region33: #{tpu_custom_call.1} parent=1 // pred_fallthru
      _
    // Predicated region
    $region34: #{tpu_custom_call.1} parent=1 // pred_check
      _
    $region35: #{tpu_custom_call.1} parent=1 // pred_check_branch
      %72 = sbr.rel (0) target = $region37
    $region36: #{tpu_custom_call.1} parent=1 // pred_region
      %73 = dma.done [#allocation6], 1024
    $region37: #{tpu_custom_call.1} parent=1 // pred_fallthru
      _
    // Predicated region
    $region38: #{tpu_custom_call.1} parent=1 // pred_check
      _
    $region39: #{tpu_custom_call.1} parent=1 // pred_check_branch
      %75 = sbr.rel (0) target = $region41
    $region40: #{tpu_custom_call.1} parent=1 // pred_region
      %76 = dma.done [#allocation6], 1024
    $region41: #{tpu_custom_call.1} parent=1 // pred_fallthru
      _
    // Predicated region
    $region42: #{tpu_custom_call.1} parent=1 // pred_check
      _
    $region43: #{tpu_custom_call.1} parent=1 // pred_check_branch
      %78 = sbr.rel (0) target = $region45
    $region44: #{tpu_custom_call.1} parent=1 // pred_region
      %79 = dma.done [#allocation9], 1024
    $region45: #{tpu_custom_call.1} parent=1 // pred_fallthru
      _
    %v81 = vld [vmem:[#allocation2] sm:$0xff]
    %v82 = vld [vmem:[#allocation5] sm:$0xf]
    %v83 = vld [vmem:[#allocation5 + $0x4] sm:$0xf]
    %v84 = vld [vmem:[#allocation5 + $0x8] sm:$0xf]
    %v85 = vld [vmem:[#allocation5 + $0xc] sm:$0xf]
    %v86 = vld [vmem:[#allocation5 + $0x10] sm:$0xf]
    %v87 = vld [vmem:[#allocation5 + $0x14] sm:$0xf]
    %v88 = vld [vmem:[#allocation5 + $0x18] sm:$0xf]
    %v89 = vld [vmem:[#allocation5 + $0x1c] sm:$0xf]
    %v90 = vld [vmem:[#allocation5 + $0x20] sm:$0xf]
    %v91 = vld [vmem:[#allocation5 + $0x24] sm:$0xf]
    %v92 = vld [vmem:[#allocation5 + $0x28] sm:$0xf]
    %v93 = vld [vmem:[#allocation5 + $0x2c] sm:$0xf]
    %v94 = vld [vmem:[#allocation5 + $0x30] sm:$0xf]
    %v95 = vld [vmem:[#allocation5 + $0x34] sm:$0xf]
    %v96 = vld [vmem:[#allocation5 + $0x38] sm:$0xf]
    %v97 = vld [vmem:[#allocation5 + $0x3c] sm:$0xf]
    %v98 = vld [vmem:[%s2] sm:$0x1]
    %v99 = vunpack.c.l.bf16 %v98
    %v100 = vpack.c.bf16 %v81, %v81
    %v101 = vlaneseq
    %v102 = vshrl.u32 %v101, 7
    %v103 = vsub.s32 0, %v102
    %v104 = vrot.slane %v99, %v103
    %v121 = vunpack.c.l.b16 %v82
    %v122 = vunpack.c.l.b16 %v83
    %v123 = vunpack.c.l.b16 %v84
    %v124 = vunpack.c.l.b16 %v85
    %v125 = vunpack.c.l.b16 %v86
    %v126 = vunpack.c.l.b16 %v87
    %v127 = vunpack.c.l.b16 %v88
    %v128 = vunpack.c.l.b16 %v89
    %v129 = vunpack.c.l.b16 %v90
    %v130 = vunpack.c.l.b16 %v91
    %v131 = vunpack.c.l.b16 %v92
    %v132 = vunpack.c.l.b16 %v93
    %v133 = vunpack.c.l.b16 %v94
    %v134 = vunpack.c.l.b16 %v95
    %v135 = vunpack.c.l.b16 %v96
    %v136 = vunpack.c.l.b16 %v97
    %v137 = vpack.c.b16 %v122, %v121
    %v138 = vpack.c.b16 %v124, %v123
    %v139 = vpack.c.b16 %v126, %v125
    %v140 = vpack.c.b16 %v128, %v127
    %v141 = vpack.c.b16 %v130, %v129
    %v142 = vpack.c.b16 %v132, %v131
    %v143 = vpack.c.b16 %v134, %v133
    %v144 = vpack.c.b16 %v136, %v135
    %153 = vmatprep.subr.bf16.mxu0 0
    %154 = vmatpush1.bf16.msra.mxu0 %v137
    %155 = vmatprep.subr.bf16.mxu0 0
    %156 = vmatpush1.bf16.msra.mxu0 %v138
    %157 = vmatprep.subr.bf16.mxu0 0
    %158 = vmatpush1.bf16.msra.mxu0 %v139
    %159 = vmatprep.subr.bf16.mxu0 0
    %160 = vmatpush1.bf16.msra.mxu0 %v140
    %161 = vmatprep.subr.bf16.mxu0 0
    %162 = vmatpush1.bf16.msra.mxu0 %v141
    %163 = vmatprep.subr.bf16.mxu0 0
    %164 = vmatpush1.bf16.msra.mxu0 %v142
    %165 = vmatprep.subr.bf16.mxu0 0
    %166 = vmatpush1.bf16.msra.mxu0 %v143
    %167 = vmatprep.subr.bf16.mxu0 0
    %168 = vmatpush1.bf16.msra.mxu0 %v144
    %169 = vmatprep.subr.bf16.mxu0 0
    %170 = vmatpush1.bf16.msra.mxu0 0
    %171 = vmatprep.subr.bf16.mxu0 0
    %172 = vmatpush1.bf16.msra.mxu0 0
    %173 = vmatprep.subr.bf16.mxu0 0
    %174 = vmatpush1.bf16.msra.mxu0 0
    %175 = vmatprep.subr.bf16.mxu0 0
    %176 = vmatpush1.bf16.msra.mxu0 0
    %177 = vmatprep.subr.bf16.mxu0 0
    %178 = vmatpush1.bf16.msra.mxu0 0
    %179 = vmatprep.subr.bf16.mxu0 0
    %180 = vmatpush1.bf16.msra.mxu0 0
    %181 = vmatprep.subr.bf16.mxu0 0
    %182 = vmatpush1.bf16.msra.mxu0 0
    %183 = vmatprep.subr.bf16.mxu0 0
    %184 = vmatpush1.bf16.msra.mxu0 0
    %185 = vmatprep.mubr.bf16.mxu0 0
    %186 = vmatmul.mubr.bf16.gmra.mrb[0].mxu0 %v100
    %v187 = vpop.f32.mrb[0].mxu0
    %v188 = vadd.f32 %v104, %v187
    %v189 = vpop.f32.mrb[0].mxu0
    %v190 = vpop.f32.mrb[0].mxu0
    %v191 = vpop.f32.mrb[0].mxu0
    %192 = vdwg.mxu0
    %v193 = vmax.f32 %v188, 0.0
    %v194 = vld [vmem:[#allocation7] sm:$0xf]
    %v195 = vld [vmem:[#allocation7 + $0x4] sm:$0xf]
    %v196 = vld [vmem:[#allocation7 + $0x8] sm:$0xf]
    %v197 = vld [vmem:[#allocation7 + $0xc] sm:$0xf]
    %v198 = vld [vmem:[#allocation7 + $0x10] sm:$0xf]
    %v199 = vld [vmem:[#allocation7 + $0x14] sm:$0xf]
    %v200 = vld [vmem:[#allocation7 + $0x18] sm:$0xf]
    %v201 = vld [vmem:[#allocation7 + $0x1c] sm:$0xf]
    %v202 = vld [vmem:[#allocation7 + $0x20] sm:$0xf]
    %v203 = vld [vmem:[#allocation7 + $0x24] sm:$0xf]
    %v204 = vld [vmem:[#allocation7 + $0x28] sm:$0xf]
    %v205 = vld [vmem:[#allocation7 + $0x2c] sm:$0xf]
    %v206 = vld [vmem:[#allocation7 + $0x30] sm:$0xf]
    %v207 = vld [vmem:[#allocation7 + $0x34] sm:$0xf]
    %v208 = vld [vmem:[#allocation7 + $0x38] sm:$0xf]
    %v209 = vld [vmem:[#allocation7 + $0x3c] sm:$0xf]
    %v210 = vld [vmem:[%s4] sm:$0x1]
    %v211 = vunpack.c.l.bf16 %v210
    %v212 = vpack.c.bf16 %v193, %v193
    %v213 = vlaneseq
    %v214 = vshrl.u32 %v213, 7
    %v215 = vsub.s32 0, %v214
    %v216 = vrot.slane %v211, %v215
    %v233 = vunpack.c.l.b16 %v194
    %v234 = vunpack.c.l.b16 %v195
    %v235 = vunpack.c.l.b16 %v196
    %v236 = vunpack.c.l.b16 %v197
    %v237 = vunpack.c.l.b16 %v198
    %v238 = vunpack.c.l.b16 %v199
    %v239 = vunpack.c.l.b16 %v200
    %v240 = vunpack.c.l.b16 %v201
    %v241 = vunpack.c.l.b16 %v202
    %v242 = vunpack.c.l.b16 %v203
    %v243 = vunpack.c.l.b16 %v204
    %v244 = vunpack.c.l.b16 %v205
    %v245 = vunpack.c.l.b16 %v206
    %v246 = vunpack.c.l.b16 %v207
    %v247 = vunpack.c.l.b16 %v208
    %v248 = vunpack.c.l.b16 %v209
    %v249 = vpack.c.b16 %v234, %v233
    %v250 = vpack.c.b16 %v236, %v235
    %v251 = vpack.c.b16 %v238, %v237
    %v252 = vpack.c.b16 %v240, %v239
    %v253 = vpack.c.b16 %v242, %v241
    %v254 = vpack.c.b16 %v244, %v243
    %v255 = vpack.c.b16 %v246, %v245
    %v256 = vpack.c.b16 %v248, %v247
    %265 = vmatprep.subr.bf16.mxu0 0
    %266 = vmatpush1.bf16.msra.mxu0 %v249
    %267 = vmatprep.subr.bf16.mxu0 0
    %268 = vmatpush1.bf16.msra.mxu0 %v250
    %269 = vmatprep.subr.bf16.mxu0 0
    %270 = vmatpush1.bf16.msra.mxu0 %v251
    %271 = vmatprep.subr.bf16.mxu0 0
    %272 = vmatpush1.bf16.msra.mxu0 %v252
    %273 = vmatprep.subr.bf16.mxu0 0
    %274 = vmatpush1.bf16.msra.mxu0 %v253
    %275 = vmatprep.subr.bf16.mxu0 0
    %276 = vmatpush1.bf16.msra.mxu0 %v254
    %277 = vmatprep.subr.bf16.mxu0 0
    %278 = vmatpush1.bf16.msra.mxu0 %v255
    %279 = vmatprep.subr.bf16.mxu0 0
    %280 = vmatpush1.bf16.msra.mxu0 %v256
    %281 = vmatprep.subr.bf16.mxu0 0
    %282 = vmatpush1.bf16.msra.mxu0 0
    %283 = vmatprep.subr.bf16.mxu0 0
    %284 = vmatpush1.bf16.msra.mxu0 0
    %285 = vmatprep.subr.bf16.mxu0 0
    %286 = vmatpush1.bf16.msra.mxu0 0
    %287 = vmatprep.subr.bf16.mxu0 0
    %288 = vmatpush1.bf16.msra.mxu0 0
    %289 = vmatprep.subr.bf16.mxu0 0
    %290 = vmatpush1.bf16.msra.mxu0 0
    %291 = vmatprep.subr.bf16.mxu0 0
    %292 = vmatpush1.bf16.msra.mxu0 0
    %293 = vmatprep.subr.bf16.mxu0 0
    %294 = vmatpush1.bf16.msra.mxu0 0
    %295 = vmatprep.subr.bf16.mxu0 0
    %296 = vmatpush1.bf16.msra.mxu0 0
    %297 = vmatprep.mubr.bf16.mxu0 0
    %298 = vmatmul.mubr.bf16.gmra.mrb[0].mxu0 %v212
    %v299 = vpop.f32.mrb[0].mxu0
    %v300 = vadd.f32 %v216, %v299
    %v301 = vpop.f32.mrb[0].mxu0
    %v302 = vpop.f32.mrb[0].mxu0
    %v303 = vpop.f32.mrb[0].mxu0
    %304 = vdwg.mxu0
    %v305 = vmax.f32 %v300, 0.0
    %v306 = vld [vmem:[#allocation8] sm:$0xf]
    %v307 = vld [vmem:[#allocation8 + $0x4] sm:$0xf]
    %v308 = vld [vmem:[#allocation8 + $0x8] sm:$0xf]
    %v309 = vld [vmem:[#allocation8 + $0xc] sm:$0xf]
    %v310 = vld [vmem:[#allocation8 + $0x10] sm:$0xf]
    %v311 = vld [vmem:[#allocation8 + $0x14] sm:$0xf]
    %v312 = vld [vmem:[#allocation8 + $0x18] sm:$0xf]
    %v313 = vld [vmem:[#allocation8 + $0x1c] sm:$0xf]
    %v314 = vld [vmem:[#allocation8 + $0x20] sm:$0xf]
    %v315 = vld [vmem:[#allocation8 + $0x24] sm:$0xf]
    %v316 = vld [vmem:[#allocation8 + $0x28] sm:$0xf]
    %v317 = vld [vmem:[#allocation8 + $0x2c] sm:$0xf]
    %v318 = vld [vmem:[#allocation8 + $0x30] sm:$0xf]
    %v319 = vld [vmem:[#allocation8 + $0x34] sm:$0xf]
    %v320 = vld [vmem:[#allocation8 + $0x38] sm:$0xf]
    %v321 = vld [vmem:[#allocation8 + $0x3c] sm:$0xf]
    %v322 = vld [vmem:[%s6] sm:$0x1]
    %v323 = vunpack.c.l.bf16 %v322
    %v324 = vpack.c.bf16 %v305, %v305
    %v325 = vlaneseq
    %v326 = vshrl.u32 %v325, 7
    %v327 = vsub.s32 0, %v326
    %v328 = vrot.slane %v323, %v327
    %v345 = vunpack.c.l.b16 %v306
    %v346 = vunpack.c.l.b16 %v307
    %v347 = vunpack.c.l.b16 %v308
    %v348 = vunpack.c.l.b16 %v309
    %v349 = vunpack.c.l.b16 %v310
    %v350 = vunpack.c.l.b16 %v311
    %v351 = vunpack.c.l.b16 %v312
    %v352 = vunpack.c.l.b16 %v313
    %v353 = vunpack.c.l.b16 %v314
    %v354 = vunpack.c.l.b16 %v315
    %v355 = vunpack.c.l.b16 %v316
    %v356 = vunpack.c.l.b16 %v317
    %v357 = vunpack.c.l.b16 %v318
    %v358 = vunpack.c.l.b16 %v319
    %v359 = vunpack.c.l.b16 %v320
    %v360 = vunpack.c.l.b16 %v321
    %v361 = vpack.c.b16 %v346, %v345
    %v362 = vpack.c.b16 %v348, %v347
    %v363 = vpack.c.b16 %v350, %v349
    %v364 = vpack.c.b16 %v352, %v351
    %v365 = vpack.c.b16 %v354, %v353
    %v366 = vpack.c.b16 %v356, %v355
    %v367 = vpack.c.b16 %v358, %v357
    %v368 = vpack.c.b16 %v360, %v359
    %377 = vmatprep.subr.bf16.mxu0 0
    %378 = vmatpush1.bf16.msra.mxu0 %v361
    %379 = vmatprep.subr.bf16.mxu0 0
    %380 = vmatpush1.bf16.msra.mxu0 %v362
    %381 = vmatprep.subr.bf16.mxu0 0
    %382 = vmatpush1.bf16.msra.mxu0 %v363
    %383 = vmatprep.subr.bf16.mxu0 0
    %384 = vmatpush1.bf16.msra.mxu0 %v364
    %385 = vmatprep.subr.bf16.mxu0 0
    %386 = vmatpush1.bf16.msra.mxu0 %v365
    %387 = vmatprep.subr.bf16.mxu0 0
    %388 = vmatpush1.bf16.msra.mxu0 %v366
    %389 = vmatprep.subr.bf16.mxu0 0
    %390 = vmatpush1.bf16.msra.mxu0 %v367
    %391 = vmatprep.subr.bf16.mxu0 0
    %392 = vmatpush1.bf16.msra.mxu0 %v368
    %393 = vmatprep.subr.bf16.mxu0 0
    %394 = vmatpush1.bf16.msra.mxu0 0
    %395 = vmatprep.subr.bf16.mxu0 0
    %396 = vmatpush1.bf16.msra.mxu0 0
    %397 = vmatprep.subr.bf16.mxu0 0
    %398 = vmatpush1.bf16.msra.mxu0 0
    %399 = vmatprep.subr.bf16.mxu0 0
    %400 = vmatpush1.bf16.msra.mxu0 0
    %401 = vmatprep.subr.bf16.mxu0 0
    %402 = vmatpush1.bf16.msra.mxu0 0
    %403 = vmatprep.subr.bf16.mxu0 0
    %404 = vmatpush1.bf16.msra.mxu0 0
    %405 = vmatprep.subr.bf16.mxu0 0
    %406 = vmatpush1.bf16.msra.mxu0 0
    %407 = vmatprep.subr.bf16.mxu0 0
    %408 = vmatpush1.bf16.msra.mxu0 0
    %409 = vmatprep.mubr.bf16.mxu0 0
    %410 = vmatmul.mubr.bf16.gmra.mrb[0].mxu0 %v324
    %v411 = vpop.f32.mrb[0].mxu0
    %v412 = vadd.f32 %v328, %v411
    %v413 = vpop.f32.mrb[0].mxu0
    %v414 = vpop.f32.mrb[0].mxu0
    %v415 = vpop.f32.mrb[0].mxu0
    %416 = vdwg.mxu0
    %417 = vst [vmem:[#allocation10] sm:$0xff] %v412
    // Predicated region
    $region46: #{tpu_custom_call.1} parent=1 // pred_check
      _
    $region47: #{tpu_custom_call.1} parent=1 // pred_check_branch
      %419 = sbr.rel (0) target = $region49
    $region48: #{tpu_custom_call.1} parent=1 // pred_region
      %s421 = ssub.s32 128, 128
      %422 = vsyncadd [#allocation4], %s421
      %s424 = sshll.u32 [#allocation10], 4
      %s425 = int_to_ptr.vmem [resolvable:$true] %s424
      %427 = dma.vmem_to_hbm [thread:$0]  %s425, 128, %s7, [#allocation4]
    $region49: #{tpu_custom_call.1} parent=1 // pred_fallthru
      _
    // Predicated region
    $region50: #{tpu_custom_call.1} parent=1 // pred_check
      _
    $region51: #{tpu_custom_call.1} parent=1 // pred_check_branch
      %429 = sbr.rel (0) target = $region53
    $region52: #{tpu_custom_call.1} parent=1 // pred_region
      %430 = dma.done [#allocation4], 128
    $region53: #{tpu_custom_call.1} parent=1 // pred_fallthru
      _
    %431 = vsyncpa [#allocation3], 1
    %432 = vsyncpa [#allocation6], 1
    %433 = vsyncpa [#allocation9], 1
    %434 = vsyncpa [#allocation4], 1

// kernel: tpu_custom_call.1
$region0: #{tpu_custom_call.1}
  #allocation0 [shape = 'u32[]', space=smem, size = 0x4, offset = 0x4, fixed_abs, tag = 'smem constant byte address 0x4 - core index']
  #allocation1 [shape = 'u32[144,128]{1,0:T(1,128)}', space=vmem, size = 0x12000, scoped, tag = 'internal scratch']
  %s0 = inlined_call_operand.hbm [shape: f32[8,128], index: 0, kind: input, shape index: {}]
  %s1 = inlined_call_operand.hbm [shape: bf16[128,128], index: 1, kind: input, shape index: {}]
  %s2 = inlined_call_operand.vmem [shape: bf16[1,128], index: 2, kind: input, shape index: {}]
  %s3 = inlined_call_operand.hbm [shape: bf16[128,128], index: 3, kind: input, shape index: {}]
  %s4 = inlined_call_operand.vmem [shape: bf16[1,128], index: 4, kind: input, shape index: {}]
  %s5 = inlined_call_operand.hbm [shape: bf16[128,128], index: 5, kind: input, shape index: {}]
  %s6 = inlined_call_operand.vmem [shape: bf16[1,128], index: 6, kind: input, shape index: {}]
  %s7 = inlined_call_operand.hbm [shape: f32[8,128], index: 7, kind: output, shape index: {}]
  %s8 = sld [smem:[#allocation0]]
  $region54: #{tpu_custom_call.1} parent=0
    _
  %s10 = ssub.s32 1, %s8
  %s11 = scalar_select 0, %s10, %s8
  $region1: #{tpu_custom_call.1} parent=0
    #allocation2 [shape = 'u8[4096]{0}', space=vmem, size = 0x1000, scoped, tag = 'input window, operand 0, single buffered']
    #allocation3 [shape = 's32[1]{0}', space=sflag, size = 0x4, scoped, tag = 'scoped memory for tpu_custom_call.1']
    #allocation4 [shape = 's32[1]{0}', space=sflag, size = 0x4, scoped, tag = 'scoped memory for tpu_custom_call.1']
    #allocation5 [shape = 'u8[32768]{0}', space=vmem, size = 0x8000, scoped, tag = 'input window, operand 1, single buffered']
    #allocation6 [shape = 's32[1]{0}', space=sflag, size = 0x4, scoped, tag = 'scoped memory for tpu_custom_call.1']
    #allocation7 [shape = 'u8[32768]{0}', space=vmem, size = 0x8000, scoped, tag = 'input window, operand 3, single buffered']
    #allocation8 [shape = 'u8[32768]{0}', space=vmem, size = 0x8000, scoped, tag = 'input window, operand 5, single buffered']
    #allocation9 [shape = 's32[1]{0}', space=sflag, size = 0x4, scoped, tag = 'scoped memory for tpu_custom_call.1']
    #allocation10 [shape = 'u8[4096]{0}', space=vmem, size = 0x1000, scoped, tag = 'output window, operand 0, single buffered']
    %12 = vsyncpa [#allocation3], 0
    %13 = vsyncpa [#allocation6], 0
    %14 = vsyncpa [#allocation9], 0
    %15 = vsyncpa [#allocation4], 0
    // Predicated region
    $region2: #{tpu_custom_call.1} parent=1 // pred_check
      _
    $region3: #{tpu_custom_call.1} parent=1 // pred_check_branch
      %17 = sbr.rel (0) target = $region5
    $region4: #{tpu_custom_call.1} parent=1 // pred_region
      %s19 = ssub.s32 128, 128
      %20 = vsyncadd [#allocation3], %s19
      %s22 = sshll.u32 [#allocation2], 4
      %s23 = int_to_ptr.vmem [resolvable:$true] %s22
      %25 = dma.hbm_to_vmem [thread:$0]  %s0, 128, %s23, [#allocation3]
    $region5: #{tpu_custom_call.1} parent=1 // pred_fallthru
      _
    // Predicated region
    $region6: #{tpu_custom_call.1} parent=1 // pred_check
      _
    $region7: #{tpu_custom_call.1} parent=1 // pred_check_branch
      %27 = sbr.rel (0) target = $region9
    $region8: #{tpu_custom_call.1} parent=1 // pred_region
      %s29 = ssub.s32 1024, 1024
      %30 = vsyncadd [#allocation6], %s29
      %s31 = sshll.u32 [#allocation5], 4
      %s32 = int_to_ptr.vmem [resolvable:$true] %s31
      %37 = dma.hbm_to_vmem [thread:$0]  %s1, 1024, %s32, [#allocation6], 64, 64, 4
    $region9: #{tpu_custom_call.1} parent=1 // pred_fallthru
      _
    // Predicated region
    $region10: #{tpu_custom_call.1} parent=1 // pred_check
      _
    $region11: #{tpu_custom_call.1} parent=1 // pred_check_branch
      %39 = sbr.rel (0) target = $region13
    $region12: #{tpu_custom_call.1} parent=1 // pred_region
      _
    $region13: #{tpu_custom_call.1} parent=1 // pred_fallthru
      _
    // Predicated region
    $region14: #{tpu_custom_call.1} parent=1 // pred_check
      _
    $region15: #{tpu_custom_call.1} parent=1 // pred_check_branch
      %41 = sbr.rel (0) target = $region17
    $region16: #{tpu_custom_call.1} parent=1 // pred_region
      %s43 = ssub.s32 1024, 1024
      %44 = vsyncadd [#allocation6], %s43
      %s45 = sshll.u32 [#allocation7], 4
      %s46 = int_to_ptr.vmem [resolvable:$true] %s45
      %51 = dma.hbm_to_vmem [thread:$0]  %s3, 1024, %s46, [#allocation6], 64, 64, 4
    $region17: #{tpu_custom_call.1} parent=1 // pred_fallthru
      _
    // Predicated region
    $region18: #{tpu_custom_call.1} parent=1 // pred_check
      _
    $region19: #{tpu_custom_call.1} parent=1 // pred_check_branch
      %53 = sbr.rel (0) target = $region21
    $region20: #{tpu_custom_call.1} parent=1 // pred_region
      _
    $region21: #{tpu_custom_call.1} parent=1 // pred_fallthru
      _
    // Predicated region
    $region22: #{tpu_custom_call.1} parent=1 // pred_check
      _
    $region23: #{tpu_custom_call.1} parent=1 // pred_check_branch
      %55 = sbr.rel (0) target = $region25
    $region24: #{tpu_custom_call.1} parent=1 // pred_region
      %s57 = ssub.s32 1024, 1024
      %58 = vsyncadd [#allocation9], %s57
      %s59 = sshll.u32 [#allocation8], 4
      %s60 = int_to_ptr.vmem [resolvable:$true] %s59
      %65 = dma.hbm_to_vmem [thread:$0]  %s5, 1024, %s60, [#allocation9], 64, 64, 4
    $region25: #{tpu_custom_call.1} parent=1 // pred_fallthru
      _
    // Predicated region
    $region26: #{tpu_custom_call.1} parent=1 // pred_check
      _
    $region27: #{tpu_custom_call.1} parent=1 // pred_check_branch
      %67 = sbr.rel (0) target = $region29
    $region28: #{tpu_custom_call.1} parent=1 // pred_region
      _
    $region29: #{tpu_custom_call.1} parent=1 // pred_fallthru
      _
    // Predicated region
    $region30: #{tpu_custom_call.1} parent=1 // pred_check
      _
    $region31: #{tpu_custom_call.1} parent=1 // pred_check_branch
      %69 = sbr.rel (0) target = $region33
    $region32: #{tpu_custom_call.1} parent=1 // pred_region
      %70 = dma.done [#allocation3], 128
    $region33: #{tpu_custom_call.1} parent=1 // pred_fallthru
      _
    // Predicated region
    $region34: #{tpu_custom_call.1} parent=1 // pred_check
      _
    $region35: #{tpu_custom_call.1} parent=1 // pred_check_branch
      %72 = sbr.rel (0) target = $region37
    $region36: #{tpu_custom_call.1} parent=1 // pred_region
      %73 = dma.done [#allocation6], 1024
    $region37: #{tpu_custom_call.1} parent=1 // pred_fallthru
      _
    // Predicated region
    $region38: #{tpu_custom_call.1} parent=1 // pred_check
      _
    $region39: #{tpu_custom_call.1} parent=1 // pred_check_branch
      %75 = sbr.rel (0) target = $region41
    $region40: #{tpu_custom_call.1} parent=1 // pred_region
      %76 = dma.done [#allocation6], 1024
    $region41: #{tpu_custom_call.1} parent=1 // pred_fallthru
      _
    // Predicated region
    $region42: #{tpu_custom_call.1} parent=1 // pred_check
      _
    $region43: #{tpu_custom_call.1} parent=1 // pred_check_branch
      %78 = sbr.rel (0) target = $region45
    $region44: #{tpu_custom_call.1} parent=1 // pred_region
      %79 = dma.done [#allocation9], 1024
    $region45: #{tpu_custom_call.1} parent=1 // pred_fallthru
      _
    %v81 = vld [vmem:[#allocation2] sm:$0xff]
    %v82 = vld [vmem:[#allocation5] sm:$0xf]
    %v83 = vld [vmem:[#allocation5 + $0x4] sm:$0xf]
    %v84 = vld [vmem:[#allocation5 + $0x8] sm:$0xf]
    %v85 = vld [vmem:[#allocation5 + $0xc] sm:$0xf]
    %v86 = vld [vmem:[#allocation5 + $0x10] sm:$0xf]
    %v87 = vld [vmem:[#allocation5 + $0x14] sm:$0xf]
    %v88 = vld [vmem:[#allocation5 + $0x18] sm:$0xf]
    %v89 = vld [vmem:[#allocation5 + $0x1c] sm:$0xf]
    %v90 = vld [vmem:[#allocation5 + $0x20] sm:$0xf]
    %v91 = vld [vmem:[#allocation5 + $0x24] sm:$0xf]
    %v92 = vld [vmem:[#allocation5 + $0x28] sm:$0xf]
    %v93 = vld [vmem:[#allocation5 + $0x2c] sm:$0xf]
    %v94 = vld [vmem:[#allocation5 + $0x30] sm:$0xf]
    %v95 = vld [vmem:[#allocation5 + $0x34] sm:$0xf]
    %v96 = vld [vmem:[#allocation5 + $0x38] sm:$0xf]
    %v97 = vld [vmem:[#allocation5 + $0x3c] sm:$0xf]
    %v98 = vld [vmem:[%s2] sm:$0x1]
    %v99 = vunpack.c.l.bf16 %v98
    %v100 = vpack.c.bf16 %v81, %v81
    %v101 = vlaneseq
    %v102 = vshrl.u32 %v101, 7
    %v103 = vsub.s32 0, %v102
    %v104 = vrot.slane %v99, %v103
    %v121 = vunpack.c.l.b16 %v82
    %v122 = vunpack.c.l.b16 %v83
    %v123 = vunpack.c.l.b16 %v84
    %v124 = vunpack.c.l.b16 %v85
    %v125 = vunpack.c.l.b16 %v86
    %v126 = vunpack.c.l.b16 %v87
    %v127 = vunpack.c.l.b16 %v88
    %v128 = vunpack.c.l.b16 %v89
    %v129 = vunpack.c.l.b16 %v90
    %v130 = vunpack.c.l.b16 %v91
    %v131 = vunpack.c.l.b16 %v92
    %v132 = vunpack.c.l.b16 %v93
    %v133 = vunpack.c.l.b16 %v94
    %v134 = vunpack.c.l.b16 %v95
    %v135 = vunpack.c.l.b16 %v96
    %v136 = vunpack.c.l.b16 %v97
    %v137 = vpack.c.b16 %v122, %v121
    %v138 = vpack.c.b16 %v124, %v123
    %v139 = vpack.c.b16 %v126, %v125
    %v140 = vpack.c.b16 %v128, %v127
    %v141 = vpack.c.b16 %v130, %v129
    %v142 = vpack.c.b16 %v132, %v131
    %v143 = vpack.c.b16 %v134, %v133
    %v144 = vpack.c.b16 %v136, %v135
    %153 = vmatprep.subr.bf16.mxu0 0
    %154 = vmatpush1.bf16.msra.mxu0 %v137
    %155 = vmatprep.subr.bf16.mxu0 0
    %156 = vmatpush1.bf16.msra.mxu0 %v138
    %157 = vmatprep.subr.bf16.mxu0 0
    %158 = vmatpush1.bf16.msra.mxu0 %v139
    %159 = vmatprep.subr.bf16.mxu0 0
    %160 = vmatpush1.bf16.msra.mxu0 %v140
    %161 = vmatprep.subr.bf16.mxu0 0
    %162 = vmatpush1.bf16.msra.mxu0 %v141
    %163 = vmatprep.subr.bf16.mxu0 0
    %164 = vmatpush1.bf16.msra.mxu0 %v142
    %165 = vmatprep.subr.bf16.mxu0 0
    %166 = vmatpush1.bf16.msra.mxu0 %v143
    %167 = vmatprep.subr.bf16.mxu0 0
    %168 = vmatpush1.bf16.msra.mxu0 %v144
    %169 = vmatprep.subr.bf16.mxu0 0
    %170 = vmatpush1.bf16.msra.mxu0 0
    %171 = vmatprep.subr.bf16.mxu0 0
    %172 = vmatpush1.bf16.msra.mxu0 0
    %173 = vmatprep.subr.bf16.mxu0 0
    %174 = vmatpush1.bf16.msra.mxu0 0
    %175 = vmatprep.subr.bf16.mxu0 0
    %176 = vmatpush1.bf16.msra.mxu0 0
    %177 = vmatprep.subr.bf16.mxu0 0
    %178 = vmatpush1.bf16.msra.mxu0 0
    %179 = vmatprep.subr.bf16.mxu0 0
    %180 = vmatpush1.bf16.msra.mxu0 0
    %181 = vmatprep.subr.bf16.mxu0 0
    %182 = vmatpush1.bf16.msra.mxu0 0
    %183 = vmatprep.subr.bf16.mxu0 0
    %184 = vmatpush1.bf16.msra.mxu0 0
    %185 = vmatprep.mubr.bf16.mxu0 0
    %186 = vmatmul.mubr.bf16.gmra.mrb[0].mxu0 %v100
    %v187 = vpop.f32.mrb[0].mxu0
    %v188 = vadd.f32 %v104, %v187
    %v189 = vpop.f32.mrb[0].mxu0
    %v190 = vpop.f32.mrb[0].mxu0
    %v191 = vpop.f32.mrb[0].mxu0
    %192 = vdwg.mxu0
    %v193 = vmax.f32 %v188, 0.0
    %v194 = vld [vmem:[#allocation7] sm:$0xf]
    %v195 = vld [vmem:[#allocation7 + $0x4] sm:$0xf]
    %v196 = vld [vmem:[#allocation7 + $0x8] sm:$0xf]
    %v197 = vld [vmem:[#allocation7 + $0xc] sm:$0xf]
    %v198 = vld [vmem:[#allocation7 + $0x10] sm:$0xf]
    %v199 = vld [vmem:[#allocation7 + $0x14] sm:$0xf]
    %v200 = vld [vmem:[#allocation7 + $0x18] sm:$0xf]
    %v201 = vld [vmem:[#allocation7 + $0x1c] sm:$0xf]
    %v202 = vld [vmem:[#allocation7 + $0x20] sm:$0xf]
    %v203 = vld [vmem:[#allocation7 + $0x24] sm:$0xf]
    %v204 = vld [vmem:[#allocation7 + $0x28] sm:$0xf]
    %v205 = vld [vmem:[#allocation7 + $0x2c] sm:$0xf]
    %v206 = vld [vmem:[#allocation7 + $0x30] sm:$0xf]
    %v207 = vld [vmem:[#allocation7 + $0x34] sm:$0xf]
    %v208 = vld [vmem:[#allocation7 + $0x38] sm:$0xf]
    %v209 = vld [vmem:[#allocation7 + $0x3c] sm:$0xf]
    %v210 = vld [vmem:[%s4] sm:$0x1]
    %v211 = vunpack.c.l.bf16 %v210
    %v212 = vpack.c.bf16 %v193, %v193
    %v213 = vlaneseq
    %v214 = vshrl.u32 %v213, 7
    %v215 = vsub.s32 0, %v214
    %v216 = vrot.slane %v211, %v215
    %v233 = vunpack.c.l.b16 %v194
    %v234 = vunpack.c.l.b16 %v195
    %v235 = vunpack.c.l.b16 %v196
    %v236 = vunpack.c.l.b16 %v197
    %v237 = vunpack.c.l.b16 %v198
    %v238 = vunpack.c.l.b16 %v199
    %v239 = vunpack.c.l.b16 %v200
    %v240 = vunpack.c.l.b16 %v201
    %v241 = vunpack.c.l.b16 %v202
    %v242 = vunpack.c.l.b16 %v203
    %v243 = vunpack.c.l.b16 %v204
    %v244 = vunpack.c.l.b16 %v205
    %v245 = vunpack.c.l.b16 %v206
    %v246 = vunpack.c.l.b16 %v207
    %v247 = vunpack.c.l.b16 %v208
    %v248 = vunpack.c.l.b16 %v209
    %v249 = vpack.c.b16 %v234, %v233
    %v250 = vpack.c.b16 %v236, %v235
    %v251 = vpack.c.b16 %v238, %v237
    %v252 = vpack.c.b16 %v240, %v239
    %v253 = vpack.c.b16 %v242, %v241
    %v254 = vpack.c.b16 %v244, %v243
    %v255 = vpack.c.b16 %v246, %v245
    %v256 = vpack.c.b16 %v248, %v247
    %265 = vmatprep.subr.bf16.mxu0 0
    %266 = vmatpush1.bf16.msra.mxu0 %v249
    %267 = vmatprep.subr.bf16.mxu0 0
    %268 = vmatpush1.bf16.msra.mxu0 %v250
    %269 = vmatprep.subr.bf16.mxu0 0
    %270 = vmatpush1.bf16.msra.mxu0 %v251
    %271 = vmatprep.subr.bf16.mxu0 0
    %272 = vmatpush1.bf16.msra.mxu0 %v252
    %273 = vmatprep.subr.bf16.mxu0 0
    %274 = vmatpush1.bf16.msra.mxu0 %v253
    %275 = vmatprep.subr.bf16.mxu0 0
    %276 = vmatpush1.bf16.msra.mxu0 %v254
    %277 = vmatprep.subr.bf16.mxu0 0
    %278 = vmatpush1.bf16.msra.mxu0 %v255
    %279 = vmatprep.subr.bf16.mxu0 0
    %280 = vmatpush1.bf16.msra.mxu0 %v256
    %281 = vmatprep.subr.bf16.mxu0 0
    %282 = vmatpush1.bf16.msra.mxu0 0
    %283 = vmatprep.subr.bf16.mxu0 0
    %284 = vmatpush1.bf16.msra.mxu0 0
    %285 = vmatprep.subr.bf16.mxu0 0
    %286 = vmatpush1.bf16.msra.mxu0 0
    %287 = vmatprep.subr.bf16.mxu0 0
    %288 = vmatpush1.bf16.msra.mxu0 0
    %289 = vmatprep.subr.bf16.mxu0 0
    %290 = vmatpush1.bf16.msra.mxu0 0
    %291 = vmatprep.subr.bf16.mxu0 0
    %292 = vmatpush1.bf16.msra.mxu0 0
    %293 = vmatprep.subr.bf16.mxu0 0
    %294 = vmatpush1.bf16.msra.mxu0 0
    %295 = vmatprep.subr.bf16.mxu0 0
    %296 = vmatpush1.bf16.msra.mxu0 0
    %297 = vmatprep.mubr.bf16.mxu0 0
    %298 = vmatmul.mubr.bf16.gmra.mrb[0].mxu0 %v212
    %v299 = vpop.f32.mrb[0].mxu0
    %v300 = vadd.f32 %v216, %v299
    %v301 = vpop.f32.mrb[0].mxu0
    %v302 = vpop.f32.mrb[0].mxu0
    %v303 = vpop.f32.mrb[0].mxu0
    %304 = vdwg.mxu0
    %v305 = vmax.f32 %v300, 0.0
    %v306 = vld [vmem:[#allocation8] sm:$0xf]
    %v307 = vld [vmem:[#allocation8 + $0x4] sm:$0xf]
    %v308 = vld [vmem:[#allocation8 + $0x8] sm:$0xf]
    %v309 = vld [vmem:[#allocation8 + $0xc] sm:$0xf]
    %v310 = vld [vmem:[#allocation8 + $0x10] sm:$0xf]
    %v311 = vld [vmem:[#allocation8 + $0x14] sm:$0xf]
    %v312 = vld [vmem:[#allocation8 + $0x18] sm:$0xf]
    %v313 = vld [vmem:[#allocation8 + $0x1c] sm:$0xf]
    %v314 = vld [vmem:[#allocation8 + $0x20] sm:$0xf]
    %v315 = vld [vmem:[#allocation8 + $0x24] sm:$0xf]
    %v316 = vld [vmem:[#allocation8 + $0x28] sm:$0xf]
    %v317 = vld [vmem:[#allocation8 + $0x2c] sm:$0xf]
    %v318 = vld [vmem:[#allocation8 + $0x30] sm:$0xf]
    %v319 = vld [vmem:[#allocation8 + $0x34] sm:$0xf]
    %v320 = vld [vmem:[#allocation8 + $0x38] sm:$0xf]
    %v321 = vld [vmem:[#allocation8 + $0x3c] sm:$0xf]
    %v322 = vld [vmem:[%s6] sm:$0x1]
    %v323 = vunpack.c.l.bf16 %v322
    %v324 = vpack.c.bf16 %v305, %v305
    %v325 = vlaneseq
    %v326 = vshrl.u32 %v325, 7
    %v327 = vsub.s32 0, %v326
    %v328 = vrot.slane %v323, %v327
    %v345 = vunpack.c.l.b16 %v306
    %v346 = vunpack.c.l.b16 %v307
    %v347 = vunpack.c.l.b16 %v308
    %v348 = vunpack.c.l.b16 %v309
    %v349 = vunpack.c.l.b16 %v310
    %v350 = vunpack.c.l.b16 %v311
    %v351 = vunpack.c.l.b16 %v312
    %v352 = vunpack.c.l.b16 %v313
    %v353 = vunpack.c.l.b16 %v314
    %v354 = vunpack.c.l.b16 %v315
    %v355 = vunpack.c.l.b16 %v316
    %v356 = vunpack.c.l.b16 %v317
    %v357 = vunpack.c.l.b16 %v318
    %v358 = vunpack.c.l.b16 %v319
    %v359 = vunpack.c.l.b16 %v320
    %v360 = vunpack.c.l.b16 %v321
    %v361 = vpack.c.b16 %v346, %v345
    %v362 = vpack.c.b16 %v348, %v347
    %v363 = vpack.c.b16 %v350, %v349
    %v364 = vpack.c.b16 %v352, %v351
    %v365 = vpack.c.b16 %v354, %v353
    %v366 = vpack.c.b16 %v356, %v355
    %v367 = vpack.c.b16 %v358, %v357
    %v368 = vpack.c.b16 %v360, %v359
    %377 = vmatprep.subr.bf16.mxu0 0
    %378 = vmatpush1.bf16.msra.mxu0 %v361
    %379 = vmatprep.subr.bf16.mxu0 0
    %380 = vmatpush1.bf16.msra.mxu0 %v362
    %381 = vmatprep.subr.bf16.mxu0 0
    %382 = vmatpush1.bf16.msra.mxu0 %v363
    %383 = vmatprep.subr.bf16.mxu0 0
    %384 = vmatpush1.bf16.msra.mxu0 %v364
    %385 = vmatprep.subr.bf16.mxu0 0
    %386 = vmatpush1.bf16.msra.mxu0 %v365
    %387 = vmatprep.subr.bf16.mxu0 0
    %388 = vmatpush1.bf16.msra.mxu0 %v366
    %389 = vmatprep.subr.bf16.mxu0 0
    %390 = vmatpush1.bf16.msra.mxu0 %v367
    %391 = vmatprep.subr.bf16.mxu0 0
    %392 = vmatpush1.bf16.msra.mxu0 %v368
    %393 = vmatprep.subr.bf16.mxu0 0
    %394 = vmatpush1.bf16.msra.mxu0 0
    %395 = vmatprep.subr.bf16.mxu0 0
    %396 = vmatpush1.bf16.msra.mxu0 0
    %397 = vmatprep.subr.bf16.mxu0 0
    %398 = vmatpush1.bf16.msra.mxu0 0
    %399 = vmatprep.subr.bf16.mxu0 0
    %400 = vmatpush1.bf16.msra.mxu0 0
    %401 = vmatprep.subr.bf16.mxu0 0
    %402 = vmatpush1.bf16.msra.mxu0 0
    %403 = vmatprep.subr.bf16.mxu0 0
    %404 = vmatpush1.bf16.msra.mxu0 0
    %405 = vmatprep.subr.bf16.mxu0 0
    %406 = vmatpush1.bf16.msra.mxu0 0
    %407 = vmatprep.subr.bf16.mxu0 0
    %408 = vmatpush1.bf16.msra.mxu0 0
    %409 = vmatprep.mubr.bf16.mxu0 0
    %410 = vmatmul.mubr.bf16.gmra.mrb[0].mxu0 %v324
    %v411 = vpop.f32.mrb[0].mxu0
    %v412 = vadd.f32 %v328, %v411
    %v413 = vpop.f32.mrb[0].mxu0
    %v414 = vpop.f32.mrb[0].mxu0
    %v415 = vpop.f32.mrb[0].mxu0
    %416 = vdwg.mxu0
    %417 = vst [vmem:[#allocation10] sm:$0xff] %v412
    // Predicated region
    $region46: #{tpu_custom_call.1} parent=1 // pred_check
      _
    $region47: #{tpu_custom_call.1} parent=1 // pred_check_branch
      %419 = sbr.rel (0) target = $region49
    $region48: #{tpu_custom_call.1} parent=1 // pred_region
      %s421 = ssub.s32 128, 128
      %422 = vsyncadd [#allocation4], %s421
      %s424 = sshll.u32 [#allocation10], 4
      %s425 = int_to_ptr.vmem [resolvable:$true] %s424
      %427 = dma.vmem_to_hbm [thread:$0]  %s425, 128, %s7, [#allocation4]
    $region49: #{tpu_custom_call.1} parent=1 // pred_fallthru
      _
    // Predicated region
    $region50: #{tpu_custom_call.1} parent=1 // pred_check
      _
    $region51: #{tpu_custom_call.1} parent=1 // pred_check_branch
      %429 = sbr.rel (0) target = $region53
    $region52: #{tpu_custom_call.1} parent=1 // pred_region
      %430 = dma.done [#allocation4], 128
    $region53: #{tpu_custom_call.1} parent=1 // pred_fallthru
      _
    %431 = vsyncpa [#allocation3], 1
    %432 = vsyncpa [#allocation6], 1
    %433 = vsyncpa [#allocation9], 1
    %434 = vsyncpa [#allocation4], 1

</llo_original>
